<compile_context>
chip_gen: v6e
topology: v6e:2x2x1
jax: 0.10.0
libtpu: 0.0.40
codegen_flags: <defaults>
</compile_context>

<pallas_src>
import jax
import jax.numpy as jnp
from jax.experimental import pallas as pl
from jax.experimental.pallas import tpu as pltpu

# ----------------------------- config -----------------------------
START_DIM = 32
LAST_DIM1 = 4
LAST_DIM2 = 8
TARGET_DIM = LAST_DIM1 * LAST_DIM2        # 32
HIDDEN1 = 64
HIDDEN2 = 64

FOLD = 4                                   # batch rows folded into lanes
LANE_IN = START_DIM * FOLD                 # 128
LANE_H1 = HIDDEN1 * FOLD                   # 256
LANE_H2 = HIDDEN2 * FOLD                   # 256
LANE_OUT = TARGET_DIM * FOLD               # 128


# ----------------------------- kernel -----------------------------
def base_func1_kernel(x_ref, w1_ref, w2_ref, w3_ref, b_ref, o_ref):
    # Packed, lane-tiled biases: row 0 -> b1 (256), row 1 -> b2 (256),
    # row 2 -> b3 (first 128 lanes).  Static slices -> no runtime cost.
    b1 = b_ref[0:1, :LANE_H1]
    b2 = b_ref[1:2, :LANE_H2]
    b3 = b_ref[2:3, :LANE_OUT]

    # Linear(32->64) on 4 folded rows: (TMf,128)@(128,256), bf16 MXU / f32 acc.
    x = x_ref[...].astype(jnp.bfloat16)
    h = jnp.dot(x, w1_ref[...], preferred_element_type=jnp.float32) + b1
    h = jnp.maximum(h, 0.0)                                   # ReLU (f32 VPU)
    # Linear(64->64): (TMf,256)@(256,256)
    h = jnp.dot(h.astype(jnp.bfloat16), w2_ref[...],
                preferred_element_type=jnp.float32) + b2
    h = jnp.tanh(h)                                           # Tanh (f32 EUP)
    # Linear(64->32): (TMf,256)@(256,128)
    out = jnp.dot(h.astype(jnp.bfloat16), w3_ref[...],
                  preferred_element_type=jnp.float32) + b3
    o_ref[...] = out.astype(o_ref.dtype)


# ----------------------------- helpers -----------------------------
def _cdiv(a, b):
    return -(-a // b)


def _round_up(a, m):
    return _cdiv(a, m) * m


def fold_params(params):
    """Build block-diagonal bf16 weights + one packed f32 bias block (once)."""
    w1, w2, w3, b1, b2, b3 = params               # f32, (in,out) layout
    eye = jnp.eye(FOLD, dtype=jnp.float32)
    W1 = jnp.kron(eye, w1).astype(jnp.bfloat16)   # (128, 256)
    W2 = jnp.kron(eye, w2).astype(jnp.bfloat16)   # (256, 256)
    W3 = jnp.kron(eye, w3).astype(jnp.bfloat16)   # (256, 128)
    bias = jnp.zeros((3, LANE_H1), jnp.float32)
    bias = bias.at[0, :LANE_H1].set(jnp.tile(b1[0], FOLD))
    bias = bias.at[1, :LANE_H2].set(jnp.tile(b2[0], FOLD))
    bias = bias.at[2, :LANE_OUT].set(jnp.tile(b3[0], FOLD))
    return W1, W2, W3, bias


# ----------------------------- wrapper -----------------------------
def base_func1_forward(h, folded_params, *, tm=4096):
    """h: (B, 32) float32 -> (B, 4, 8) float32.  tm = batch-row tile (pre-fold)."""
    W1, W2, W3, bias = folded_params
    B = h.shape[0]

    # Folded-row tile: multiple of 8 sublanes, balanced across the grid so
    # worst-case padding stays small; >=2 tiles when possible (v7x megacore).
    tmf = max(8, ((tm // FOLD) // 8) * 8)
    bf = _cdiv(B, FOLD)                           # folded rows actually needed
    n_tiles = max(1, _cdiv(bf, tmf))
    if n_tiles == 1 and bf >= 16:
        n_tiles = 2
    tmf = _round_up(_cdiv(bf, n_tiles), 8)
    bf_pad = n_tiles * tmf
    Bp = bf_pad * FOLD
    if Bp != B:
        h = jnp.pad(h, ((0, Bp - B), (0, 0)))
    x_fold = h.reshape(bf_pad, LANE_IN)           # free row-major metadata reshape

    mac_fold = LANE_IN * LANE_H1 + LANE_H1 * LANE_H2 + LANE_H2 * LANE_OUT
    weight_bytes = 2 * mac_fold + 3 * LANE_H1 * 4  # bf16 weights + packed f32 bias
    cost = pl.CostEstimate(
        flops=2 * bf_pad * mac_fold,
        transcendentals=bf_pad * LANE_H2,
        bytes_accessed=bf_pad * (LANE_IN + LANE_OUT) * 4 + weight_bytes,
    )

    out_fold = pl.pallas_call(
        base_func1_kernel,
        out_shape=jax.ShapeDtypeStruct((bf_pad, LANE_OUT), jnp.float32),
        grid_spec=pltpu.PrefetchScalarGridSpec(
            num_scalar_prefetch=0,
            grid=(n_tiles,),
            in_specs=[
                # Folded activation tile: streamed / double-buffered along the grid.
                pl.BlockSpec((tmf, LANE_IN), lambda i: (i, 0)),
                # Block-diag weights + packed bias: constant maps -> VMEM resident.
                pl.BlockSpec((LANE_IN, LANE_H1), lambda i: (0, 0)),
                pl.BlockSpec((LANE_H1, LANE_H2), lambda i: (0, 0)),
                pl.BlockSpec((LANE_H2, LANE_OUT), lambda i: (0, 0)),
                pl.BlockSpec((3, LANE_H1), lambda i: (0, 0)),
            ],
            out_specs=pl.BlockSpec((tmf, LANE_OUT), lambda i: (i, 0)),
        ),
        compiler_params=pltpu.CompilerParams(
            dimension_semantics=("parallel",),     # megacore-shardable on v7x
        ),
        cost_estimate=cost,
    )(x_fold, W1, W2, W3, bias)

    # Un-fold (free reshape), drop padded rows BEFORE the (-1,4,8) view.
    out = out_fold.reshape(Bp, TARGET_DIM)[:B]
    return out.reshape(-1, LAST_DIM1, LAST_DIM2)


# ------------------------- parameter init --------------------------
def init_params(key):
    """nn.Linear-style init (uniform +/- 1/sqrt(fan_in)), f32, (in,out) layout."""
    def linear(key, fan_in, fan_out):
        kw, kb = jax.random.split(key)
        bound = 1.0 / (fan_in ** 0.5)
        w = jax.random.uniform(kw, (fan_in, fan_out), jnp.float32, -bound, bound)
        b = jax.random.uniform(kb, (1, fan_out), jnp.float32, -bound, bound)
        return w, b

    k1, k2, k3 = jax.random.split(key, 3)
    w1, b1 = linear(k1, START_DIM, HIDDEN1)
    w2, b2 = linear(k2, HIDDEN1, HIDDEN2)
    w3, b3 = linear(k3, HIDDEN2, TARGET_DIM)
    return (w1, w2, w3, b1, b2, b3)


# ----------------------------- main -------------------------------
if __name__ == "__main__":
    key = jax.random.PRNGKey(0)
    k_params, k_x1, k_x2 = jax.random.split(key, 3)
    params = init_params(k_params)
    folded = fold_params(params)

    # Reference 1: true f32 math (the original torch module's semantics).
    def ref_f32(h, params):
        w1, w2, w3, b1, b2, b3 = params
        r = jnp.dot(h, w1, precision=jax.lax.Precision.HIGHEST) + b1
        r = jnp.maximum(r, 0.0)
        r = jnp.dot(r, w2, precision=jax.lax.Precision.HIGHEST) + b2
        r = jnp.tanh(r)
        r = jnp.dot(r, w3, precision=jax.lax.Precision.HIGHEST) + b3
        return r.reshape(-1, LAST_DIM1, LAST_DIM2)

    # Reference 2: the kernel's own bf16-operand / f32-accumulate math.
    def ref_bf16(h, params):
        w1, w2, w3, b1, b2, b3 = params
        r = jnp.dot(h.astype(jnp.bfloat16), w1.astype(jnp.bfloat16),
                    preferred_element_type=jnp.float32) + b1
        r = jnp.maximum(r, 0.0)
        r = jnp.dot(r.astype(jnp.bfloat16), w2.astype(jnp.bfloat16),
                    preferred_element_type=jnp.float32) + b2
        r = jnp.tanh(r)
        r = jnp.dot(r.astype(jnp.bfloat16), w3.astype(jnp.bfloat16),
                    preferred_element_type=jnp.float32) + b3
        return r.reshape(-1, LAST_DIM1, LAST_DIM2)

    # Test 1: small batch, single grid tile, default tile size.
    B1 = 8
    h1 = jax.random.normal(k_x1, (B1, START_DIM), dtype=jnp.float32)
    out1 = jax.block_until_ready(base_func1_forward(h1, folded))
    assert out1.shape == (B1, LAST_DIM1, LAST_DIM2), out1.shape
    # Tight check vs the matched bf16 math, loose check vs true f32 semantics
    # (bf16 weights/operands introduce ~1e-2-level deviation at worst).
    assert jnp.allclose(out1, ref_bf16(h1, params), atol=2e-3, rtol=2e-3)
    assert jnp.allclose(out1, ref_f32(h1, params), atol=5e-2, rtol=5e-2)

    # Test 2: multi-tile grid (balanced tiles) + batch padding (B % (4*tile) != 0).
    B2 = 100
    h2 = jax.random.normal(k_x2, (B2, START_DIM), dtype=jnp.float32)
    out2 = jax.block_until_ready(base_func1_forward(h2, folded, tm=64))
    assert out2.shape == (B2, LAST_DIM1, LAST_DIM2), out2.shape
    assert jnp.allclose(out2, ref_bf16(h2, params), atol=2e-3, rtol=2e-3)
    assert jnp.allclose(out2, ref_f32(h2, params), atol=5e-2, rtol=5e-2)

    print("KERNEL_OK")
</pallas_src>

<mosaic_0001>
module attributes {stable_mosaic.version = 11 : i64} {
  func.func @base_func1_kernel(%arg0: i32, %arg1: memref<8x128xf32, #tpu.memory_space<vmem>>, %arg2: memref<128x256xbf16, #tpu.memory_space<vmem>>, %arg3: memref<256x256xbf16, #tpu.memory_space<vmem>>, %arg4: memref<256x128xbf16, #tpu.memory_space<vmem>>, %arg5: memref<3x256xf32, #tpu.memory_space<vmem>>, %arg6: memref<8x128xf32, #tpu.memory_space<vmem>>) attributes {dimension_semantics = [#tpu.dimension_semantics<parallel>], iteration_bounds = array<i64: 1>, scalar_prefetch = 0 : i64, scratch_operands = 0 : i64, tpu.core_type = #tpu.core_type<tc>, window_params = [{transform_indices = @transform_0, window_bounds = array<i64: 8, 128>}, {pipeline_mode = #tpu.pipeline_mode<synchronous>, transform_indices = @transform_1, window_bounds = array<i64: 128, 256>}, {pipeline_mode = #tpu.pipeline_mode<synchronous>, transform_indices = @transform_2, window_bounds = array<i64: 256, 256>}, {pipeline_mode = #tpu.pipeline_mode<synchronous>, transform_indices = @transform_3, window_bounds = array<i64: 256, 128>}, {pipeline_mode = #tpu.pipeline_mode<synchronous>, transform_indices = @transform_4, window_bounds = array<i64: 3, 256>}, {transform_indices = @transform_5, window_bounds = array<i64: 8, 128>}]} {
    %c0 = arith.constant 0 : index
    %c0_0 = arith.constant 0 : index
    %0 = vector.load %arg5[%c0, %c0_0] : memref<3x256xf32, #tpu.memory_space<vmem>>, vector<1x256xf32>
    %c1 = arith.constant 1 : index
    %c0_1 = arith.constant 0 : index
    %1 = vector.load %arg5[%c1, %c0_1] : memref<3x256xf32, #tpu.memory_space<vmem>>, vector<1x256xf32>
    %c2 = arith.constant 2 : index
    %c0_2 = arith.constant 0 : index
    %2 = vector.load %arg5[%c2, %c0_2] : memref<3x256xf32, #tpu.memory_space<vmem>>, vector<1x128xf32>
    %c0_3 = arith.constant 0 : index
    %c0_4 = arith.constant 0 : index
    %3 = vector.load %arg1[%c0_3, %c0_4] : memref<8x128xf32, #tpu.memory_space<vmem>>, vector<8x128xf32>
    %4 = arith.truncf %3 : vector<8x128xf32> to vector<8x128xbf16>
    %c0_5 = arith.constant 0 : index
    %c0_6 = arith.constant 0 : index
    %5 = vector.load %arg2[%c0_5, %c0_6] : memref<128x256xbf16, #tpu.memory_space<vmem>>, vector<128x256xbf16>
    %cst = arith.constant dense<0.000000e+00> : vector<8x256xf32>
    %6 = tpu.matmul %4, %5, %cst {dimension_numbers = #tpu.dot_dimension_numbers<[1], [0], [0], [1], [0, 0, 1, 1], [], []>} : vector<8x128xbf16>, vector<128x256xbf16>, vector<8x256xf32> -> vector<8x256xf32>
    %7 = vector.broadcast %0 : vector<1x256xf32> to vector<8x256xf32>
    %8 = arith.addf %6, %7 : vector<8x256xf32>
    %cst_7 = arith.constant 0.000000e+00 : f32
    %9 = vector.broadcast %cst_7 : f32 to vector<8x256xf32>
    %10 = arith.maximumf %8, %9 : vector<8x256xf32>
    %11 = arith.truncf %10 : vector<8x256xf32> to vector<8x256xbf16>
    %c0_8 = arith.constant 0 : index
    %c0_9 = arith.constant 0 : index
    %12 = vector.load %arg3[%c0_8, %c0_9] : memref<256x256xbf16, #tpu.memory_space<vmem>>, vector<256x256xbf16>
    %cst_10 = arith.constant dense<0.000000e+00> : vector<8x256xf32>
    %13 = tpu.matmul %11, %12, %cst_10 {dimension_numbers = #tpu.dot_dimension_numbers<[1], [0], [0], [1], [0, 0, 1, 1], [], []>} : vector<8x256xbf16>, vector<256x256xbf16>, vector<8x256xf32> -> vector<8x256xf32>
    %14 = vector.broadcast %1 : vector<1x256xf32> to vector<8x256xf32>
    %15 = arith.addf %13, %14 : vector<8x256xf32>
    %16 = math.tanh %15 : vector<8x256xf32>
    %17 = arith.truncf %16 : vector<8x256xf32> to vector<8x256xbf16>
    %c0_11 = arith.constant 0 : index
    %c0_12 = arith.constant 0 : index
    %18 = vector.load %arg4[%c0_11, %c0_12] : memref<256x128xbf16, #tpu.memory_space<vmem>>, vector<256x128xbf16>
    %cst_13 = arith.constant dense<0.000000e+00> : vector<8x128xf32>
    %19 = tpu.matmul %17, %18, %cst_13 {dimension_numbers = #tpu.dot_dimension_numbers<[1], [0], [0], [1], [0, 0, 1, 1], [], []>} : vector<8x256xbf16>, vector<256x128xbf16>, vector<8x128xf32> -> vector<8x128xf32>
    %20 = vector.broadcast %2 : vector<1x128xf32> to vector<8x128xf32>
    %21 = arith.addf %19, %20 : vector<8x128xf32>
    %c0_14 = arith.constant 0 : index
    %c0_15 = arith.constant 0 : index
    %22 = vector.load %arg6[%c0_14, %c0_15] : memref<8x128xf32, #tpu.memory_space<vmem>>, vector<8x128xf32>
    tpu.vector_store %arg6[%c0_14, %c0_15], %21 {strides = array<i32>} : memref<8x128xf32, #tpu.memory_space<vmem>>, vector<8x128xf32>,
    return
  }
  func.func @transform_0(%arg0: i32) -> (i32, i32) {
    %c0_i32 = arith.constant 0 : i32
    %c0_i32_0 = arith.constant 0 : i32
    return %arg0, %c0_i32 : i32, i32
  }
  func.func @transform_1(%arg0: i32) -> (i32, i32) {
    %c0_i32 = arith.constant 0 : i32
    %c0_i32_0 = arith.constant 0 : i32
    %c0_i32_1 = arith.constant 0 : i32
    return %c0_i32, %c0_i32_0 : i32, i32
  }
  func.func @transform_2(%arg0: i32) -> (i32, i32) {
    %c0_i32 = arith.constant 0 : i32
    %c0_i32_0 = arith.constant 0 : i32
    %c0_i32_1 = arith.constant 0 : i32
    return %c0_i32, %c0_i32_0 : i32, i32
  }
  func.func @transform_3(%arg0: i32) -> (i32, i32) {
    %c0_i32 = arith.constant 0 : i32
    %c0_i32_0 = arith.constant 0 : i32
    %c0_i32_1 = arith.constant 0 : i32
    return %c0_i32, %c0_i32_0 : i32, i32
  }
  func.func @transform_4(%arg0: i32) -> (i32, i32) {
    %c0_i32 = arith.constant 0 : i32
    %c0_i32_0 = arith.constant 0 : i32
    %c0_i32_1 = arith.constant 0 : i32
    return %c0_i32, %c0_i32_0 : i32, i32
  }
  func.func @transform_5(%arg0: i32) -> (i32, i32) {
    %c0_i32 = arith.constant 0 : i32
    %c0_i32_0 = arith.constant 0 : i32
    return %arg0, %c0_i32 : i32, i32
  }
}

</mosaic_0001>

<llo_original>
// kernel: tpu_custom_call.1
$region0: #{tpu_custom_call.1}
  #allocation0 [shape = 'u32[]', space=smem, size = 0x4, offset = 0x4, fixed_abs, tag = 'smem constant byte address 0x4 - core index']
  #allocation1 [shape = 'u32[144,128]{1,0:T(1,128)}', space=vmem, size = 0x12000, scoped, tag = 'internal scratch']
  %s0 = inlined_call_operand.hbm [shape: f32[8,128], index: 0, kind: input, shape index: {}]
  %s1 = inlined_call_operand.hbm [shape: bf16[128,256], index: 1, kind: input, shape index: {}]
  %s2 = inlined_call_operand.hbm [shape: bf16[256,256], index: 2, kind: input, shape index: {}]
  %s3 = inlined_call_operand.hbm [shape: bf16[256,128], index: 3, kind: input, shape index: {}]
  %s4 = inlined_call_operand.hbm [shape: f32[3,256], index: 4, kind: input, shape index: {}]
  %s5 = inlined_call_operand.hbm [shape: f32[8,128], index: 5, kind: output, shape index: {}]
  %s6 = sld [smem:[#allocation0]]
  $region50: #{tpu_custom_call.1} parent=0
    _
  %s8 = ssub.s32 1, %s6
  %s9 = scalar_select 0, %s8, %s6
  $region1: #{tpu_custom_call.1} parent=0
    #allocation2 [shape = 'u8[4096]{0}', space=vmem, size = 0x1000, scoped, tag = 'input window, operand 0, single buffered']
    #allocation3 [shape = 's32[1]{0}', space=sflag, size = 0x4, scoped, tag = 'scoped memory for tpu_custom_call.1']
    #allocation4 [shape = 's32[1]{0}', space=sflag, size = 0x4, scoped, tag = 'scoped memory for tpu_custom_call.1']
    #allocation5 [shape = 'u8[65536]{0}', space=vmem, size = 0x10000, scoped, tag = 'input window, operand 1, single buffered']
    #allocation6 [shape = 's32[1]{0}', space=sflag, size = 0x4, scoped, tag = 'scoped memory for tpu_custom_call.1']
    #allocation7 [shape = 'u8[131072]{0}', space=vmem, size = 0x20000, scoped, tag = 'input window, operand 2, single buffered']
    #allocation8 [shape = 'u8[65536]{0}', space=vmem, size = 0x10000, scoped, tag = 'input window, operand 3, single buffered']
    #allocation9 [shape = 's32[1]{0}', space=sflag, size = 0x4, scoped, tag = 'scoped memory for tpu_custom_call.1']
    #allocation10 [shape = 'u8[4096]{0}', space=vmem, size = 0x1000, scoped, tag = 'input window, operand 4, single buffered']
    #allocation11 [shape = 'u8[4096]{0}', space=vmem, size = 0x1000, scoped, tag = 'output window, operand 0, single buffered']
    %10 = vsyncpa [#allocation3], 0
    %11 = vsyncpa [#allocation6], 0
    %12 = vsyncpa [#allocation9], 0
    %13 = vsyncpa [#allocation4], 0
    // Predicated region
    $region2: #{tpu_custom_call.1} parent=1 // pred_check
      _
    $region3: #{tpu_custom_call.1} parent=1 // pred_check_branch
      %15 = sbr.rel (0) target = $region5
    $region4: #{tpu_custom_call.1} parent=1 // pred_region
      %s17 = ssub.s32 128, 128
      %18 = vsyncadd [#allocation3], %s17
      %s20 = sshll.u32 [#allocation2], 4
      %s21 = int_to_ptr.vmem [resolvable:$true] %s20
      %23 = dma.hbm_to_vmem [thread:$0]  %s0, 128, %s21, [#allocation3]
    $region5: #{tpu_custom_call.1} parent=1 // pred_fallthru
      _
    // Predicated region
    $region6: #{tpu_custom_call.1} parent=1 // pred_check
      _
    $region7: #{tpu_custom_call.1} parent=1 // pred_check_branch
      %25 = sbr.rel (0) target = $region9
    $region8: #{tpu_custom_call.1} parent=1 // pred_region
      %s27 = ssub.s32 2048, 2048
      %28 = vsyncadd [#allocation6], %s27
      %s29 = sshll.u32 [#allocation5], 4
      %s30 = int_to_ptr.vmem [resolvable:$true] %s29
      %35 = dma.hbm_to_vmem [thread:$0]  %s1, 2048, %s30, [#allocation6], 128, 128, 8
    $region9: #{tpu_custom_call.1} parent=1 // pred_fallthru
      _
    // Predicated region
    $region10: #{tpu_custom_call.1} parent=1 // pred_check
      _
    $region11: #{tpu_custom_call.1} parent=1 // pred_check_branch
      %37 = sbr.rel (0) target = $region13
    $region12: #{tpu_custom_call.1} parent=1 // pred_region
      %s39 = ssub.s32 4096, 4096
      %40 = vsyncadd [#allocation6], %s39
      %s41 = sshll.u32 [#allocation7], 4
      %s42 = int_to_ptr.vmem [resolvable:$true] %s41
      %47 = dma.hbm_to_vmem [thread:$0]  %s2, 4096, %s42, [#allocation6], 128, 128, 8
    $region13: #{tpu_custom_call.1} parent=1 // pred_fallthru
      _
    // Predicated region
    $region14: #{tpu_custom_call.1} parent=1 // pred_check
      _
    $region15: #{tpu_custom_call.1} parent=1 // pred_check_branch
      %49 = sbr.rel (0) target = $region17
    $region16: #{tpu_custom_call.1} parent=1 // pred_region
      %s51 = ssub.s32 2048, 2048
      %52 = vsyncadd [#allocation9], %s51
      %s53 = sshll.u32 [#allocation8], 4
      %s54 = int_to_ptr.vmem [resolvable:$true] %s53
      %59 = dma.hbm_to_vmem [thread:$0]  %s3, 2048, %s54, [#allocation9], 64, 64, 4
    $region17: #{tpu_custom_call.1} parent=1 // pred_fallthru
      _
    // Predicated region
    $region18: #{tpu_custom_call.1} parent=1 // pred_check
      _
    $region19: #{tpu_custom_call.1} parent=1 // pred_check_branch
      %61 = sbr.rel (0) target = $region21
    $region20: #{tpu_custom_call.1} parent=1 // pred_region
      %s63 = ssub.s32 128, 128
      %64 = vsyncadd [#allocation9], %s63
      %s66 = sshll.u32 [#allocation10], 4
      %s67 = int_to_ptr.vmem [resolvable:$true] %s66
      %69 = dma.hbm_to_vmem [thread:$0]  %s4, 128, %s67, [#allocation9]
    $region21: #{tpu_custom_call.1} parent=1 // pred_fallthru
      _
    // Predicated region
    $region22: #{tpu_custom_call.1} parent=1 // pred_check
      _
    $region23: #{tpu_custom_call.1} parent=1 // pred_check_branch
      %71 = sbr.rel (0) target = $region25
    $region24: #{tpu_custom_call.1} parent=1 // pred_region
      %72 = dma.done [#allocation3], 128
    $region25: #{tpu_custom_call.1} parent=1 // pred_fallthru
      _
    // Predicated region
    $region26: #{tpu_custom_call.1} parent=1 // pred_check
      _
    $region27: #{tpu_custom_call.1} parent=1 // pred_check_branch
      %74 = sbr.rel (0) target = $region29
    $region28: #{tpu_custom_call.1} parent=1 // pred_region
      %75 = dma.done [#allocation6], 2048
    $region29: #{tpu_custom_call.1} parent=1 // pred_fallthru
      _
    // Predicated region
    $region30: #{tpu_custom_call.1} parent=1 // pred_check
      _
    $region31: #{tpu_custom_call.1} parent=1 // pred_check_branch
      %77 = sbr.rel (0) target = $region33
    $region32: #{tpu_custom_call.1} parent=1 // pred_region
      %78 = dma.done [#allocation6], 4096
    $region33: #{tpu_custom_call.1} parent=1 // pred_fallthru
      _
    // Predicated region
    $region34: #{tpu_custom_call.1} parent=1 // pred_check
      _
    $region35: #{tpu_custom_call.1} parent=1 // pred_check_branch
      %80 = sbr.rel (0) target = $region37
    $region36: #{tpu_custom_call.1} parent=1 // pred_region
      %81 = dma.done [#allocation9], 2048
    $region37: #{tpu_custom_call.1} parent=1 // pred_fallthru
      _
    // Predicated region
    $region38: #{tpu_custom_call.1} parent=1 // pred_check
      _
    $region39: #{tpu_custom_call.1} parent=1 // pred_check_branch
      %83 = sbr.rel (0) target = $region41
    $region40: #{tpu_custom_call.1} parent=1 // pred_region
      %84 = dma.done [#allocation9], 128
    $region41: #{tpu_custom_call.1} parent=1 // pred_fallthru
      _
    %v86 = vld [vmem:[#allocation10] ss:$4 sm:$0x3]
    %s87 = scalar_lea.vmem [#allocation10], 1
    %v88 = vld [vmem:[%s87] ss:$4 sm:$0x3]
    %v89 = vld [vmem:[#allocation10 + $0x2] sm:$0x1]
    %v90 = vld [vmem:[#allocation2] sm:$0xff]
    %v91 = vpack.c.bf16 %v90, %v90
    %v92 = vld [vmem:[#allocation5] sm:$0xff]
    %v93 = vld [vmem:[#allocation5 + $0x8] sm:$0xff]
    %v94 = vld [vmem:[#allocation5 + $0x10] sm:$0xff]
    %v95 = vld [vmem:[#allocation5 + $0x18] sm:$0xff]
    %v96 = vld [vmem:[#allocation5 + $0x20] sm:$0xff]
    %v97 = vld [vmem:[#allocation5 + $0x28] sm:$0xff]
    %v98 = vld [vmem:[#allocation5 + $0x30] sm:$0xff]
    %v99 = vld [vmem:[#allocation5 + $0x38] sm:$0xff]
    %v100 = vld [vmem:[#allocation5 + $0x40] sm:$0xff]
    %v101 = vld [vmem:[#allocation5 + $0x48] sm:$0xff]
    %v102 = vld [vmem:[#allocation5 + $0x50] sm:$0xff]
    %v103 = vld [vmem:[#allocation5 + $0x58] sm:$0xff]
    %v104 = vld [vmem:[#allocation5 + $0x60] sm:$0xff]
    %v105 = vld [vmem:[#allocation5 + $0x68] sm:$0xff]
    %v106 = vld [vmem:[#allocation5 + $0x70] sm:$0xff]
    %v107 = vld [vmem:[#allocation5 + $0x78] sm:$0xff]
    %v109 = vlaneseq
    %v110 = vshrl.u32 %v109, 7
    %v111 = vsub.s32 0, %v110
    %v112 = vrot.slane %v86, %v111
    %v113 = vlaneseq
    %v114 = vshrl.u32 %v113, 7
    %v115 = vsub.s32 1, %v114
    %v116 = vrot.slane %v86, %v115
    %v135 = vunpack.c.l.b16 %v92
    %v136 = vunpack.c.h.b16 %v92
    %v137 = vunpack.c.l.b16 %v93
    %v138 = vunpack.c.h.b16 %v93
    %v139 = vunpack.c.l.b16 %v94
    %v140 = vunpack.c.h.b16 %v94
    %v141 = vunpack.c.l.b16 %v95
    %v142 = vunpack.c.h.b16 %v95
    %v143 = vunpack.c.l.b16 %v96
    %v144 = vunpack.c.h.b16 %v96
    %v145 = vunpack.c.l.b16 %v97
    %v146 = vunpack.c.h.b16 %v97
    %v147 = vunpack.c.l.b16 %v98
    %v148 = vunpack.c.h.b16 %v98
    %v149 = vunpack.c.l.b16 %v99
    %v150 = vunpack.c.h.b16 %v99
    %v151 = vunpack.c.l.b16 %v100
    %v152 = vunpack.c.h.b16 %v100
    %v153 = vunpack.c.l.b16 %v101
    %v154 = vunpack.c.h.b16 %v101
    %v155 = vunpack.c.l.b16 %v102
    %v156 = vunpack.c.h.b16 %v102
    %v157 = vunpack.c.l.b16 %v103
    %v158 = vunpack.c.h.b16 %v103
    %v159 = vunpack.c.l.b16 %v104
    %v160 = vunpack.c.h.b16 %v104
    %v161 = vunpack.c.l.b16 %v105
    %v162 = vunpack.c.h.b16 %v105
    %v163 = vunpack.c.l.b16 %v106
    %v164 = vunpack.c.h.b16 %v106
    %v165 = vunpack.c.l.b16 %v107
    %v166 = vunpack.c.h.b16 %v107
    %v167 = vpack.c.b16 %v137, %v135
    %v168 = vpack.c.b16 %v138, %v136
    %v169 = vpack.c.b16 %v141, %v139
    %v170 = vpack.c.b16 %v142, %v140
    %v171 = vpack.c.b16 %v145, %v143
    %v172 = vpack.c.b16 %v146, %v144
    %v173 = vpack.c.b16 %v149, %v147
    %v174 = vpack.c.b16 %v150, %v148
    %v175 = vpack.c.b16 %v153, %v151
    %v176 = vpack.c.b16 %v154, %v152
    %v177 = vpack.c.b16 %v157, %v155
    %v178 = vpack.c.b16 %v158, %v156
    %v179 = vpack.c.b16 %v161, %v159
    %v180 = vpack.c.b16 %v162, %v160
    %v181 = vpack.c.b16 %v165, %v163
    %v182 = vpack.c.b16 %v166, %v164
    %199 = vmatprep.subr.bf16.mxu0 %v182
    %200 = vmatpush1.bf16.msra.mxu0 %v181
    %201 = vmatprep.subr.bf16.mxu0 %v180
    %202 = vmatpush1.bf16.msra.mxu0 %v179
    %203 = vmatprep.subr.bf16.mxu0 %v178
    %204 = vmatpush1.bf16.msra.mxu0 %v177
    %205 = vmatprep.subr.bf16.mxu0 %v176
    %206 = vmatpush1.bf16.msra.mxu0 %v175
    %207 = vmatprep.subr.bf16.mxu0 %v174
    %208 = vmatpush1.bf16.msra.mxu0 %v173
    %209 = vmatprep.subr.bf16.mxu0 %v172
    %210 = vmatpush1.bf16.msra.mxu0 %v171
    %211 = vmatprep.subr.bf16.mxu0 %v170
    %212 = vmatpush1.bf16.msra.mxu0 %v169
    %213 = vmatprep.subr.bf16.mxu0 %v168
    %214 = vmatpush1.bf16.msra.mxu0 %v167
    %215 = vmatprep.subr.bf16.mxu0 0
    %216 = vmatpush2.bf16.msra.mxu0 0
    %217 = vmatprep.subr.bf16.mxu0 0
    %218 = vmatpush2.bf16.msra.mxu0 0
    %219 = vmatprep.subr.bf16.mxu0 0
    %220 = vmatpush2.bf16.msra.mxu0 0
    %221 = vmatprep.subr.bf16.mxu0 0
    %222 = vmatpush2.bf16.msra.mxu0 0
    %223 = vmatprep.subr.bf16.mxu0 0
    %224 = vmatpush2.bf16.msra.mxu0 0
    %225 = vmatprep.subr.bf16.mxu0 0
    %226 = vmatpush2.bf16.msra.mxu0 0
    %227 = vmatprep.subr.bf16.mxu0 0
    %228 = vmatpush2.bf16.msra.mxu0 0
    %229 = vmatprep.subr.bf16.mxu0 0
    %230 = vmatpush2.bf16.msra.mxu0 0
    %231 = vmatprep.mubr.bf16.mxu0 0
    %232 = vmatmul.mubr.bf16.gmra.mxu0 %v91
    %v233 = vpop.f32.mrf.mxu0
    %v234 = vadd.f32 %v112, %v233
    %v235 = vpop.f32.mrf.mxu0
    %v236 = vadd.f32 %v116, %v235
    %v237 = vpop.f32.mrf.mxu0
    %v238 = vpop.f32.mrf.mxu0
    %239 = vdwg.mxu0
    %v240 = vmax.f32 %v234, 0.0
    %v241 = vmax.f32 %v236, 0.0
    %v242 = vpack.c.bf16 %v240, %v240
    %v243 = vpack.c.bf16 %v241, %v241
    %v244 = vld [vmem:[#allocation7] sm:$0xff]
    %v245 = vld [vmem:[#allocation7 + $0x8] sm:$0xff]
    %v246 = vld [vmem:[#allocation7 + $0x10] sm:$0xff]
    %v247 = vld [vmem:[#allocation7 + $0x18] sm:$0xff]
    %v248 = vld [vmem:[#allocation7 + $0x20] sm:$0xff]
    %v249 = vld [vmem:[#allocation7 + $0x28] sm:$0xff]
    %v250 = vld [vmem:[#allocation7 + $0x30] sm:$0xff]
    %v251 = vld [vmem:[#allocation7 + $0x38] sm:$0xff]
    %v252 = vld [vmem:[#allocation7 + $0x40] sm:$0xff]
    %v253 = vld [vmem:[#allocation7 + $0x48] sm:$0xff]
    %v254 = vld [vmem:[#allocation7 + $0x50] sm:$0xff]
    %v255 = vld [vmem:[#allocation7 + $0x58] sm:$0xff]
    %v256 = vld [vmem:[#allocation7 + $0x60] sm:$0xff]
    %v257 = vld [vmem:[#allocation7 + $0x68] sm:$0xff]
    %v258 = vld [vmem:[#allocation7 + $0x70] sm:$0xff]
    %v259 = vld [vmem:[#allocation7 + $0x78] sm:$0xff]
    %v260 = vld [vmem:[#allocation7 + $0x80] sm:$0xff]
    %v261 = vld [vmem:[#allocation7 + $0x88] sm:$0xff]
    %v262 = vld [vmem:[#allocation7 + $0x90] sm:$0xff]
    %v263 = vld [vmem:[#allocation7 + $0x98] sm:$0xff]
    %v264 = vld [vmem:[#allocation7 + $0xa0] sm:$0xff]
    %v265 = vld [vmem:[#allocation7 + $0xa8] sm:$0xff]
    %v266 = vld [vmem:[#allocation7 + $0xb0] sm:$0xff]
    %v267 = vld [vmem:[#allocation7 + $0xb8] sm:$0xff]
    %v268 = vld [vmem:[#allocation7 + $0xc0] sm:$0xff]
    %v269 = vld [vmem:[#allocation7 + $0xc8] sm:$0xff]
    %v270 = vld [vmem:[#allocation7 + $0xd0] sm:$0xff]
    %v271 = vld [vmem:[#allocation7 + $0xd8] sm:$0xff]
    %v272 = vld [vmem:[#allocation7 + $0xe0] sm:$0xff]
    %v273 = vld [vmem:[#allocation7 + $0xe8] sm:$0xff]
    %v274 = vld [vmem:[#allocation7 + $0xf0] sm:$0xff]
    %v275 = vld [vmem:[#allocation7 + $0xf8] sm:$0xff]
    %v277 = vlaneseq
    %v278 = vshrl.u32 %v277, 7
    %v279 = vsub.s32 0, %v278
    %v280 = vrot.slane %v88, %v279
    %v281 = vlaneseq
    %v282 = vshrl.u32 %v281, 7
    %v283 = vsub.s32 1, %v282
    %v284 = vrot.slane %v88, %v283
    %v319 = vunpack.c.l.b16 %v244
    %v320 = vunpack.c.h.b16 %v244
    %v321 = vunpack.c.l.b16 %v245
    %v322 = vunpack.c.h.b16 %v245
    %v323 = vunpack.c.l.b16 %v246
    %v324 = vunpack.c.h.b16 %v246
    %v325 = vunpack.c.l.b16 %v247
    %v326 = vunpack.c.h.b16 %v247
    %v327 = vunpack.c.l.b16 %v248
    %v328 = vunpack.c.h.b16 %v248
    %v329 = vunpack.c.l.b16 %v249
    %v330 = vunpack.c.h.b16 %v249
    %v331 = vunpack.c.l.b16 %v250
    %v332 = vunpack.c.h.b16 %v250
    %v333 = vunpack.c.l.b16 %v251
    %v334 = vunpack.c.h.b16 %v251
    %v335 = vunpack.c.l.b16 %v252
    %v336 = vunpack.c.h.b16 %v252
    %v337 = vunpack.c.l.b16 %v253
    %v338 = vunpack.c.h.b16 %v253
    %v339 = vunpack.c.l.b16 %v254
    %v340 = vunpack.c.h.b16 %v254
    %v341 = vunpack.c.l.b16 %v255
    %v342 = vunpack.c.h.b16 %v255
    %v343 = vunpack.c.l.b16 %v256
    %v344 = vunpack.c.h.b16 %v256
    %v345 = vunpack.c.l.b16 %v257
    %v346 = vunpack.c.h.b16 %v257
    %v347 = vunpack.c.l.b16 %v258
    %v348 = vunpack.c.h.b16 %v258
    %v349 = vunpack.c.l.b16 %v259
    %v350 = vunpack.c.h.b16 %v259
    %v351 = vunpack.c.l.b16 %v260
    %v352 = vunpack.c.h.b16 %v260
    %v353 = vunpack.c.l.b16 %v261
    %v354 = vunpack.c.h.b16 %v261
    %v355 = vunpack.c.l.b16 %v262
    %v356 = vunpack.c.h.b16 %v262
    %v357 = vunpack.c.l.b16 %v263
    %v358 = vunpack.c.h.b16 %v263
    %v359 = vunpack.c.l.b16 %v264
    %v360 = vunpack.c.h.b16 %v264
    %v361 = vunpack.c.l.b16 %v265
    %v362 = vunpack.c.h.b16 %v265
    %v363 = vunpack.c.l.b16 %v266
    %v364 = vunpack.c.h.b16 %v266
    %v365 = vunpack.c.l.b16 %v267
    %v366 = vunpack.c.h.b16 %v267
    %v367 = vunpack.c.l.b16 %v268
    %v368 = vunpack.c.h.b16 %v268
    %v369 = vunpack.c.l.b16 %v269
    %v370 = vunpack.c.h.b16 %v269
    %v371 = vunpack.c.l.b16 %v270
    %v372 = vunpack.c.h.b16 %v270
    %v373 = vunpack.c.l.b16 %v271
    %v374 = vunpack.c.h.b16 %v271
    %v375 = vunpack.c.l.b16 %v272
    %v376 = vunpack.c.h.b16 %v272
    %v377 = vunpack.c.l.b16 %v273
    %v378 = vunpack.c.h.b16 %v273
    %v379 = vunpack.c.l.b16 %v274
    %v380 = vunpack.c.h.b16 %v274
    %v381 = vunpack.c.l.b16 %v275
    %v382 = vunpack.c.h.b16 %v275
    %v383 = vpack.c.b16 %v321, %v319
    %v384 = vpack.c.b16 %v322, %v320
    %v385 = vpack.c.b16 %v325, %v323
    %v386 = vpack.c.b16 %v326, %v324
    %v387 = vpack.c.b16 %v329, %v327
    %v388 = vpack.c.b16 %v330, %v328
    %v389 = vpack.c.b16 %v333, %v331
    %v390 = vpack.c.b16 %v334, %v332
    %v391 = vpack.c.b16 %v337, %v335
    %v392 = vpack.c.b16 %v338, %v336
    %v393 = vpack.c.b16 %v341, %v339
    %v394 = vpack.c.b16 %v342, %v340
    %v395 = vpack.c.b16 %v345, %v343
    %v396 = vpack.c.b16 %v346, %v344
    %v397 = vpack.c.b16 %v349, %v347
    %v398 = vpack.c.b16 %v350, %v348
    %v399 = vpack.c.b16 %v353, %v351
    %v400 = vpack.c.b16 %v354, %v352
    %v401 = vpack.c.b16 %v357, %v355
    %v402 = vpack.c.b16 %v358, %v356
    %v403 = vpack.c.b16 %v361, %v359
    %v404 = vpack.c.b16 %v362, %v360
    %v405 = vpack.c.b16 %v365, %v363
    %v406 = vpack.c.b16 %v366, %v364
    %v407 = vpack.c.b16 %v369, %v367
    %v408 = vpack.c.b16 %v370, %v368
    %v409 = vpack.c.b16 %v373, %v371
    %v410 = vpack.c.b16 %v374, %v372
    %v411 = vpack.c.b16 %v377, %v375
    %v412 = vpack.c.b16 %v378, %v376
    %v413 = vpack.c.b16 %v381, %v379
    %v414 = vpack.c.b16 %v382, %v380
    %447 = vmatprep.subr.bf16.mxu0 %v398
    %448 = vmatpush1.bf16.msra.mxu0 %v397
    %449 = vmatprep.subr.bf16.mxu0 %v396
    %450 = vmatpush1.bf16.msra.mxu0 %v395
    %451 = vmatprep.subr.bf16.mxu0 %v394
    %452 = vmatpush1.bf16.msra.mxu0 %v393
    %453 = vmatprep.subr.bf16.mxu0 %v392
    %454 = vmatpush1.bf16.msra.mxu0 %v391
    %455 = vmatprep.subr.bf16.mxu0 %v390
    %456 = vmatpush1.bf16.msra.mxu0 %v389
    %457 = vmatprep.subr.bf16.mxu0 %v388
    %458 = vmatpush1.bf16.msra.mxu0 %v387
    %459 = vmatprep.subr.bf16.mxu0 %v386
    %460 = vmatpush1.bf16.msra.mxu0 %v385
    %461 = vmatprep.subr.bf16.mxu0 %v384
    %462 = vmatpush1.bf16.msra.mxu0 %v383
    %463 = vmatprep.subr.bf16.mxu0 %v414
    %464 = vmatpush2.bf16.msra.mxu0 %v413
    %465 = vmatprep.subr.bf16.mxu0 %v412
    %466 = vmatpush2.bf16.msra.mxu0 %v411
    %467 = vmatprep.subr.bf16.mxu0 %v410
    %468 = vmatpush2.bf16.msra.mxu0 %v409
    %469 = vmatprep.subr.bf16.mxu0 %v408
    %470 = vmatpush2.bf16.msra.mxu0 %v407
    %471 = vmatprep.subr.bf16.mxu0 %v406
    %472 = vmatpush2.bf16.msra.mxu0 %v405
    %473 = vmatprep.subr.bf16.mxu0 %v404
    %474 = vmatpush2.bf16.msra.mxu0 %v403
    %475 = vmatprep.subr.bf16.mxu0 %v402
    %476 = vmatpush2.bf16.msra.mxu0 %v401
    %477 = vmatprep.subr.bf16.mxu0 %v400
    %478 = vmatpush2.bf16.msra.mxu0 %v399
    %479 = vmatprep.mubr.bf16.mxu0 %v243
    %480 = vmatmul.mubr.bf16.gmra.mxu0 %v242
    %v481 = vpop.f32.mrf.mxu0
    %v482 = vadd.f32 %v280, %v481
    %v483 = vpop.f32.mrf.mxu0
    %v484 = vadd.f32 %v284, %v483
    %v485 = vpop.f32.mrf.mxu0
    %v486 = vpop.f32.mrf.mxu0
    %487 = vdwg.mxu0
    %v488 = vtanh.pop %v482
    %v489 = vtanh.pop %v484
    %v490 = vpack.c.bf16 %v488, %v488
    %v491 = vpack.c.bf16 %v489, %v489
    %v492 = vld [vmem:[#allocation8] sm:$0xf]
    %v493 = vld [vmem:[#allocation8 + $0x4] sm:$0xf]
    %v494 = vld [vmem:[#allocation8 + $0x8] sm:$0xf]
    %v495 = vld [vmem:[#allocation8 + $0xc] sm:$0xf]
    %v496 = vld [vmem:[#allocation8 + $0x10] sm:$0xf]
    %v497 = vld [vmem:[#allocation8 + $0x14] sm:$0xf]
    %v498 = vld [vmem:[#allocation8 + $0x18] sm:$0xf]
    %v499 = vld [vmem:[#allocation8 + $0x1c] sm:$0xf]
    %v500 = vld [vmem:[#allocation8 + $0x20] sm:$0xf]
    %v501 = vld [vmem:[#allocation8 + $0x24] sm:$0xf]
    %v502 = vld [vmem:[#allocation8 + $0x28] sm:$0xf]
    %v503 = vld [vmem:[#allocation8 + $0x2c] sm:$0xf]
    %v504 = vld [vmem:[#allocation8 + $0x30] sm:$0xf]
    %v505 = vld [vmem:[#allocation8 + $0x34] sm:$0xf]
    %v506 = vld [vmem:[#allocation8 + $0x38] sm:$0xf]
    %v507 = vld [vmem:[#allocation8 + $0x3c] sm:$0xf]
    %v508 = vld [vmem:[#allocation8 + $0x40] sm:$0xf]
    %v509 = vld [vmem:[#allocation8 + $0x44] sm:$0xf]
    %v510 = vld [vmem:[#allocation8 + $0x48] sm:$0xf]
    %v511 = vld [vmem:[#allocation8 + $0x4c] sm:$0xf]
    %v512 = vld [vmem:[#allocation8 + $0x50] sm:$0xf]
    %v513 = vld [vmem:[#allocation8 + $0x54] sm:$0xf]
    %v514 = vld [vmem:[#allocation8 + $0x58] sm:$0xf]
    %v515 = vld [vmem:[#allocation8 + $0x5c] sm:$0xf]
    %v516 = vld [vmem:[#allocation8 + $0x60] sm:$0xf]
    %v517 = vld [vmem:[#allocation8 + $0x64] sm:$0xf]
    %v518 = vld [vmem:[#allocation8 + $0x68] sm:$0xf]
    %v519 = vld [vmem:[#allocation8 + $0x6c] sm:$0xf]
    %v520 = vld [vmem:[#allocation8 + $0x70] sm:$0xf]
    %v521 = vld [vmem:[#allocation8 + $0x74] sm:$0xf]
    %v522 = vld [vmem:[#allocation8 + $0x78] sm:$0xf]
    %v523 = vld [vmem:[#allocation8 + $0x7c] sm:$0xf]
    %v524 = vlaneseq
    %v525 = vshrl.u32 %v524, 7
    %v526 = vsub.s32 0, %v525
    %v527 = vrot.slane %v89, %v526
    %v560 = vunpack.c.l.b16 %v492
    %v561 = vunpack.c.l.b16 %v493
    %v562 = vunpack.c.l.b16 %v494
    %v563 = vunpack.c.l.b16 %v495
    %v564 = vunpack.c.l.b16 %v496
    %v565 = vunpack.c.l.b16 %v497
    %v566 = vunpack.c.l.b16 %v498
    %v567 = vunpack.c.l.b16 %v499
    %v568 = vunpack.c.l.b16 %v500
    %v569 = vunpack.c.l.b16 %v501
    %v570 = vunpack.c.l.b16 %v502
    %v571 = vunpack.c.l.b16 %v503
    %v572 = vunpack.c.l.b16 %v504
    %v573 = vunpack.c.l.b16 %v505
    %v574 = vunpack.c.l.b16 %v506
    %v575 = vunpack.c.l.b16 %v507
    %v576 = vunpack.c.l.b16 %v508
    %v577 = vunpack.c.l.b16 %v509
    %v578 = vunpack.c.l.b16 %v510
    %v579 = vunpack.c.l.b16 %v511
    %v580 = vunpack.c.l.b16 %v512
    %v581 = vunpack.c.l.b16 %v513
    %v582 = vunpack.c.l.b16 %v514
    %v583 = vunpack.c.l.b16 %v515
    %v584 = vunpack.c.l.b16 %v516
    %v585 = vunpack.c.l.b16 %v517
    %v586 = vunpack.c.l.b16 %v518
    %v587 = vunpack.c.l.b16 %v519
    %v588 = vunpack.c.l.b16 %v520
    %v589 = vunpack.c.l.b16 %v521
    %v590 = vunpack.c.l.b16 %v522
    %v591 = vunpack.c.l.b16 %v523
    %v592 = vpack.c.b16 %v561, %v560
    %v593 = vpack.c.b16 %v563, %v562
    %v594 = vpack.c.b16 %v565, %v564
    %v595 = vpack.c.b16 %v567, %v566
    %v596 = vpack.c.b16 %v569, %v568
    %v597 = vpack.c.b16 %v571, %v570
    %v598 = vpack.c.b16 %v573, %v572
    %v599 = vpack.c.b16 %v575, %v574
    %v600 = vpack.c.b16 %v577, %v576
    %v601 = vpack.c.b16 %v579, %v578
    %v602 = vpack.c.b16 %v581, %v580
    %v603 = vpack.c.b16 %v583, %v582
    %v604 = vpack.c.b16 %v585, %v584
    %v605 = vpack.c.b16 %v587, %v586
    %v606 = vpack.c.b16 %v589, %v588
    %v607 = vpack.c.b16 %v591, %v590
    %624 = vmatprep.subr.bf16.mxu0 0
    %625 = vmatpush1.bf16.msra.mxu0 %v599
    %626 = vmatprep.subr.bf16.mxu0 0
    %627 = vmatpush1.bf16.msra.mxu0 %v598
    %628 = vmatprep.subr.bf16.mxu0 0
    %629 = vmatpush1.bf16.msra.mxu0 %v597
    %630 = vmatprep.subr.bf16.mxu0 0
    %631 = vmatpush1.bf16.msra.mxu0 %v596
    %632 = vmatprep.subr.bf16.mxu0 0
    %633 = vmatpush1.bf16.msra.mxu0 %v595
    %634 = vmatprep.subr.bf16.mxu0 0
    %635 = vmatpush1.bf16.msra.mxu0 %v594
    %636 = vmatprep.subr.bf16.mxu0 0
    %637 = vmatpush1.bf16.msra.mxu0 %v593
    %638 = vmatprep.subr.bf16.mxu0 0
    %639 = vmatpush1.bf16.msra.mxu0 %v592
    %640 = vmatprep.subr.bf16.mxu0 0
    %641 = vmatpush2.bf16.msra.mxu0 %v607
    %642 = vmatprep.subr.bf16.mxu0 0
    %643 = vmatpush2.bf16.msra.mxu0 %v606
    %644 = vmatprep.subr.bf16.mxu0 0
    %645 = vmatpush2.bf16.msra.mxu0 %v605
    %646 = vmatprep.subr.bf16.mxu0 0
    %647 = vmatpush2.bf16.msra.mxu0 %v604
    %648 = vmatprep.subr.bf16.mxu0 0
    %649 = vmatpush2.bf16.msra.mxu0 %v603
    %650 = vmatprep.subr.bf16.mxu0 0
    %651 = vmatpush2.bf16.msra.mxu0 %v602
    %652 = vmatprep.subr.bf16.mxu0 0
    %653 = vmatpush2.bf16.msra.mxu0 %v601
    %654 = vmatprep.subr.bf16.mxu0 0
    %655 = vmatpush2.bf16.msra.mxu0 %v600
    %656 = vmatprep.mubr.bf16.mxu0 %v491
    %657 = vmatmul.mubr.bf16.gmra.mxu0 %v490
    %v658 = vpop.f32.mrf.mxu0
    %v659 = vadd.f32 %v527, %v658
    %v660 = vpop.f32.mrf.mxu0
    %v661 = vpop.f32.mrf.mxu0
    %v662 = vpop.f32.mrf.mxu0
    %663 = vdwg.mxu0
    %664 = vst [vmem:[#allocation11] sm:$0xff] %v659
    // Predicated region
    $region42: #{tpu_custom_call.1} parent=1 // pred_check
      _
    $region43: #{tpu_custom_call.1} parent=1 // pred_check_branch
      %666 = sbr.rel (0) target = $region45
    $region44: #{tpu_custom_call.1} parent=1 // pred_region
      %s668 = ssub.s32 128, 128
      %669 = vsyncadd [#allocation4], %s668
      %s671 = sshll.u32 [#allocation11], 4
      %s672 = int_to_ptr.vmem [resolvable:$true] %s671
      %674 = dma.vmem_to_hbm [thread:$0]  %s672, 128, %s5, [#allocation4]
    $region45: #{tpu_custom_call.1} parent=1 // pred_fallthru
      _
    // Predicated region
    $region46: #{tpu_custom_call.1} parent=1 // pred_check
      _
    $region47: #{tpu_custom_call.1} parent=1 // pred_check_branch
      %676 = sbr.rel (0) target = $region49
    $region48: #{tpu_custom_call.1} parent=1 // pred_region
      %677 = dma.done [#allocation4], 128
    $region49: #{tpu_custom_call.1} parent=1 // pred_fallthru
      _
    %678 = vsyncpa [#allocation3], 1
    %679 = vsyncpa [#allocation6], 1
    %680 = vsyncpa [#allocation9], 1
    %681 = vsyncpa [#allocation4], 1

</llo_original>
